<compile_context>
chip_gen: v5e
topology: v5e:2x2
jax: 0.10.0
libtpu: 0.0.40
codegen_flags: <defaults>
</compile_context>

<pallas_src>
import functools

import jax
import jax.numpy as jnp
import numpy as np
from jax import lax
from jax.experimental import pallas as pl
from jax.experimental.pallas import tpu as pltpu

_NEG_SLOPE = 0.2
_MASK_VAL = -1e30


def _pick_row_tile(n):
    """Destination-row tile.  Capped at 256 so double-buffered (TILE_V, N)
    mask slabs + score intermediates fit v7x's 64 MiB VMEM as well as
    v5e/v6e's 128 MiB.  Multiples of 16 keep bf16 sublane tiling happy."""
    if n <= 256:
        return n
    for t in (256, 128, 64, 32, 16):
        if n % t == 0:
            return t
    # TODO(synk): pad N to a tile multiple for ragged node counts.
    return n


def _gat_kernel(num_heads, out_feats,
                h_src_ref, h_dst_ref, w_src_ref, w_dst_ref, al_ref, b_ref,
                mask_ref, o_ref):
    """One grid step == one tile of destination rows (all heads fused)."""
    d = out_feats
    hd = num_heads * d

    h_src = h_src_ref[...]                                   # (N, Fin)
    h_dst = h_dst_ref[...]                                   # (TILE_V, Fin)

    # Fused, lane-dense projections (single MXU pass per operand).
    z_all = jnp.dot(h_src, w_src_ref[...],
                    preferred_element_type=jnp.float32)      # (N, H*D)
    dst = jnp.dot(h_dst, w_dst_ref[...],
                  preferred_element_type=jnp.float32)        # (TILE_V, H*D + H)
    res = dst[:, :hd]                                        # residual proj
    er_all = dst[:, hd:]                                     # (TILE_V, H)

    al = al_ref[...]                                         # (H, D)
    mask = mask_ref[...].astype(jnp.float32)                 # (TILE_V, N) additive

    head_outs = []
    for hh in range(num_heads):                              # static, small H
        z_h = z_all[:, hh * d:(hh + 1) * d]                  # (N, D)

        # el as a (1, N) lane row: broadcast-add instead of rank-1 matmul.
        el_row = lax.dot_general(al[hh:hh + 1, :], z_h,
                                 (((1,), (1,)), ((), ())),
                                 preferred_element_type=jnp.float32)  # (1, N)
        s = er_all[:, hh:hh + 1] + el_row                    # (TILE_V, N)

        # LeakyReLU(0.2) then additive mask (order preserves DGL semantics).
        s = jnp.where(s > 0, s, _NEG_SLOPE * s)
        s = s + mask

        # Masked softmax with deferred normalization.
        m = jnp.max(s, axis=-1, keepdims=True)
        p = jnp.exp(s - m)                                   # unnormalized
        denom = jnp.sum(p, axis=-1, keepdims=True)
        agg = jnp.dot(p, z_h, preferred_element_type=jnp.float32)  # (TILE_V, D)
        # Exact reciprocal keeps the 1e-5 correctness check; approx=True is a
        # free EUP win when looser tolerance is acceptable.
        inv = pl.reciprocal(denom)
        head_outs.append(agg * inv)

    out = jnp.concatenate(head_outs, axis=-1) + res + b_ref[...]
    o_ref[...] = out.astype(o_ref.dtype)                     # lane-dense store


def gat_layer_forward(h, adj, w, attn_l, attn_r, w_res, bias):
    """Pallas GATConv forward.

    h:      (N, Fin) float32 node features
    adj:    (N, N)   dense adjacency mask, adj[dst, src] > 0 iff edge src->dst
    w:      (H, Fin, D)   per-head projection
    attn_l: (H, 1, D)     source attention vector
    attn_r: (H, 1, D)     destination attention vector
    w_res:  (H, Fin, D)   residual projection
    bias:   (H, 1, D)
    returns (N, H, D) float32  (DGL GATConv output layout)
    """
    n, fin = h.shape
    num_heads, _, d = w.shape
    hd = num_heads * d

    # ---- parameter prep (weights only; tiny, folded once by XLA) ----
    w_src = jnp.transpose(w, (1, 0, 2)).reshape(fin, hd)         # [W_h0|W_h1|..]
    w_res_all = jnp.transpose(w_res, (1, 0, 2)).reshape(fin, hd)
    # er[v, h] = <(h[v] @ W_h), attn_r_h> = h[v] @ (W_h @ attn_r_h)
    wr = jnp.einsum("hfd,hd->fh", w, attn_r[:, 0, :])            # (Fin, H)
    w_dst = jnp.concatenate([w_res_all, wr], axis=1)             # (Fin, H*D+H)
    al_mat = attn_l[:, 0, :]                                     # (H, D)
    bias_flat = bias[:, 0, :].reshape(1, hd)
    # bf16 additive mask: halves the dominant O(N^2) stream, avoids -inf NaNs.
    mask_add = jnp.where(adj > 0, 0.0, _MASK_VAL).astype(jnp.bfloat16)

    tile_v = _pick_row_tile(n)
    grid = (n // tile_v,)

    kernel = functools.partial(_gat_kernel, num_heads, d)

    out_flat = pl.pallas_call(
        kernel,
        out_shape=jax.ShapeDtypeStruct((n, hd), jnp.float32),
        grid=grid,
        in_specs=[
            pl.BlockSpec((n, fin), lambda i: (0, 0)),             # h (all sources)
            pl.BlockSpec((tile_v, fin), lambda i: (i, 0)),        # h (dst tile)
            pl.BlockSpec((fin, hd), lambda i: (0, 0)),            # fused W
            pl.BlockSpec((fin, hd + num_heads), lambda i: (0, 0)),  # [W_res | W@attn_r]
            pl.BlockSpec((num_heads, d), lambda i: (0, 0)),       # attn_l
            pl.BlockSpec((1, hd), lambda i: (0, 0)),              # bias
            pl.BlockSpec((tile_v, n), lambda i: (i, 0)),          # mask row slab
        ],
        out_specs=pl.BlockSpec((tile_v, hd), lambda i: (i, 0)),
        compiler_params=pltpu.CompilerParams(
            dimension_semantics=("parallel",)),
    )(h, h, w_src, w_dst, al_mat, bias_flat, mask_add)

    return out_flat.reshape(n, num_heads, d)                      # (N, H, D)


def reference_gat(h, adj, w, attn_l, attn_r, w_res, bias):
    """Pure-JAX reference for correctness checking."""
    z = jnp.einsum("nf,hfd->hnd", h, w)                      # (H, N, D)
    el = jnp.einsum("hnd,hd->hn", z, attn_l[:, 0, :])        # (H, N)
    er = jnp.einsum("hnd,hd->hn", z, attn_r[:, 0, :])        # (H, N)
    s = er[:, :, None] + el[:, None, :]                      # (H, dst, src)
    s = jnp.where(s > 0, s, 0.2 * s)
    s = jnp.where(adj[None] > 0, s, -jnp.inf)
    alpha = jax.nn.softmax(s, axis=-1)
    agg = jnp.einsum("hvu,hud->hvd", alpha, z)
    res = jnp.einsum("nf,hfd->hnd", h, w_res)
    out = agg + res + bias[:, 0, :][:, None, :]
    return jnp.transpose(out, (1, 0, 2))                     # (N, H, D)


if __name__ == "__main__":
    N = 16          # nodes
    IN_FEATS = 8
    OUT_FEATS = 8
    NUM_HEADS = 2

    key = jax.random.PRNGKey(0)
    k_h, k_adj, k_w, k_al, k_ar, k_res, k_b = jax.random.split(key, 7)

    # Node features.
    h = jax.random.normal(k_h, (N, IN_FEATS), dtype=jnp.float32)

    # Deterministic random graph as a dense adjacency mask with self-loops.
    adj = (jax.random.uniform(k_adj, (N, N)) < 0.3).astype(jnp.float32)
    adj = jnp.maximum(adj, jnp.eye(N, dtype=jnp.float32))    # self-loops

    # Deterministic "xavier-ish" parameter init (synthetic, not a checkpoint).
    scale = 0.1
    w = scale * jax.random.normal(k_w, (NUM_HEADS, IN_FEATS, OUT_FEATS),
                                  dtype=jnp.float32)
    attn_l = scale * jax.random.normal(k_al, (NUM_HEADS, 1, OUT_FEATS),
                                       dtype=jnp.float32)
    attn_r = scale * jax.random.normal(k_ar, (NUM_HEADS, 1, OUT_FEATS),
                                       dtype=jnp.float32)
    # residual=True and in_feats != num_heads*out_feats -> linear residual proj
    w_res = scale * jax.random.normal(k_res, (NUM_HEADS, IN_FEATS, OUT_FEATS),
                                      dtype=jnp.float32)
    bias = scale * jax.random.normal(k_b, (NUM_HEADS, 1, OUT_FEATS),
                                     dtype=jnp.float32)

    fwd = jax.jit(gat_layer_forward)
    out = fwd(h, adj, w, attn_l, attn_r, w_res, bias)
    out = jax.block_until_ready(out)

    ref = reference_gat(h, adj, w, attn_l, attn_r, w_res, bias)
    np.testing.assert_allclose(np.asarray(out), np.asarray(ref),
                               rtol=1e-4, atol=1e-5)

    assert out.shape == (N, NUM_HEADS, OUT_FEATS)
    print("KERNEL_OK")
</pallas_src>

<mosaic_0001>
module attributes {stable_mosaic.version = 11 : i64} {
  func.func @_gat_kernel(%arg0: i32, %arg1: memref<16x8xf32, #tpu.memory_space<vmem>>, %arg2: memref<16x8xf32, #tpu.memory_space<vmem>>, %arg3: memref<8x16xf32, #tpu.memory_space<vmem>>, %arg4: memref<8x18xf32, #tpu.memory_space<vmem>>, %arg5: memref<2x8xf32, #tpu.memory_space<vmem>>, %arg6: memref<1x16xf32, #tpu.memory_space<vmem>>, %arg7: memref<16x16xbf16, #tpu.memory_space<vmem>>, %arg8: memref<16x16xf32, #tpu.memory_space<vmem>>) attributes {dimension_semantics = [#tpu.dimension_semantics<parallel>], iteration_bounds = array<i64: 1>, scalar_prefetch = 0 : i64, scratch_operands = 0 : i64, tpu.core_type = #tpu.core_type<tc>, window_params = [{pipeline_mode = #tpu.pipeline_mode<synchronous>, transform_indices = @transform_0, window_bounds = array<i64: 16, 8>}, {transform_indices = @transform_1, window_bounds = array<i64: 16, 8>}, {pipeline_mode = #tpu.pipeline_mode<synchronous>, transform_indices = @transform_2, window_bounds = array<i64: 8, 16>}, {pipeline_mode = #tpu.pipeline_mode<synchronous>, transform_indices = @transform_3, window_bounds = array<i64: 8, 18>}, {pipeline_mode = #tpu.pipeline_mode<synchronous>, transform_indices = @transform_4, window_bounds = array<i64: 2, 8>}, {pipeline_mode = #tpu.pipeline_mode<synchronous>, transform_indices = @transform_5, window_bounds = array<i64: 1, 16>}, {transform_indices = @transform_6, window_bounds = array<i64: 16, 16>}, {transform_indices = @transform_7, window_bounds = array<i64: 16, 16>}]} {
    %c0 = arith.constant 0 : index
    %c0_0 = arith.constant 0 : index
    %0 = vector.load %arg1[%c0, %c0_0] : memref<16x8xf32, #tpu.memory_space<vmem>>, vector<16x8xf32>
    %c0_1 = arith.constant 0 : index
    %c0_2 = arith.constant 0 : index
    %1 = vector.load %arg2[%c0_1, %c0_2] : memref<16x8xf32, #tpu.memory_space<vmem>>, vector<16x8xf32>
    %c0_3 = arith.constant 0 : index
    %c0_4 = arith.constant 0 : index
    %2 = vector.load %arg3[%c0_3, %c0_4] : memref<8x16xf32, #tpu.memory_space<vmem>>, vector<8x16xf32>
    %cst = arith.constant dense<0.000000e+00> : vector<16x16xf32>
    %3 = tpu.matmul %0, %2, %cst {dimension_numbers = #tpu.dot_dimension_numbers<[1], [0], [0], [1], [0, 0, 1, 1], [], []>} : vector<16x8xf32>, vector<8x16xf32>, vector<16x16xf32> -> vector<16x16xf32>
    %c0_5 = arith.constant 0 : index
    %c0_6 = arith.constant 0 : index
    %4 = vector.load %arg4[%c0_5, %c0_6] : memref<8x18xf32, #tpu.memory_space<vmem>>, vector<8x18xf32>
    %cst_7 = arith.constant dense<0.000000e+00> : vector<16x18xf32>
    %5 = tpu.matmul %1, %4, %cst_7 {dimension_numbers = #tpu.dot_dimension_numbers<[1], [0], [0], [1], [0, 0, 1, 1], [], []>} : vector<16x8xf32>, vector<8x18xf32>, vector<16x18xf32> -> vector<16x18xf32>
    %6 = vector.extract_strided_slice %5 {offsets = [0, 0], sizes = [16, 16], strides = [1, 1]} : vector<16x18xf32> to vector<16x16xf32>
    %7 = vector.extract_strided_slice %5 {offsets = [0, 16], sizes = [16, 2], strides = [1, 1]} : vector<16x18xf32> to vector<16x2xf32>
    %c0_8 = arith.constant 0 : index
    %c0_9 = arith.constant 0 : index
    %8 = vector.load %arg5[%c0_8, %c0_9] : memref<2x8xf32, #tpu.memory_space<vmem>>, vector<2x8xf32>
    %c0_10 = arith.constant 0 : index
    %c0_11 = arith.constant 0 : index
    %9 = vector.load %arg7[%c0_10, %c0_11] : memref<16x16xbf16, #tpu.memory_space<vmem>>, vector<16x16xbf16>
    %10 = arith.extf %9 : vector<16x16xbf16> to vector<16x16xf32>
    %11 = vector.extract_strided_slice %3 {offsets = [0, 0], sizes = [16, 8], strides = [1, 1]} : vector<16x16xf32> to vector<16x8xf32>
    %12 = vector.extract_strided_slice %8 {offsets = [0, 0], sizes = [1, 8], strides = [1, 1]} : vector<2x8xf32> to vector<1x8xf32>
    %cst_12 = arith.constant dense<0.000000e+00> : vector<1x16xf32>
    %13 = tpu.matmul %12, %11, %cst_12 {dimension_numbers = #tpu.dot_dimension_numbers<[1], [1], [0], [0], [0, 0, 1, 0], [], []>} : vector<1x8xf32>, vector<16x8xf32>, vector<1x16xf32> -> vector<1x16xf32>
    %14 = vector.extract_strided_slice %7 {offsets = [0, 0], sizes = [16, 1], strides = [1, 1]} : vector<16x2xf32> to vector<16x1xf32>
    %15 = vector.broadcast %14 : vector<16x1xf32> to vector<16x16xf32>
    %16 = vector.broadcast %13 : vector<1x16xf32> to vector<16x16xf32>
    %17 = arith.addf %15, %16 : vector<16x16xf32>
    %cst_13 = arith.constant 0.000000e+00 : f32
    %18 = vector.broadcast %cst_13 : f32 to vector<16x16xf32>
    %19 = arith.cmpf ogt, %17, %18 : vector<16x16xf32>
    %cst_14 = arith.constant 2.000000e-01 : f32
    %20 = vector.broadcast %cst_14 : f32 to vector<16x16xf32>
    %21 = arith.mulf %20, %17 : vector<16x16xf32>
    %22 = arith.select %19, %17, %21 : vector<16x16xi1>, vector<16x16xf32>
    %23 = arith.addf %22, %10 : vector<16x16xf32>
    %cst_15 = arith.constant dense<0xFF800000> : vector<16xf32>
    %24 = vector.multi_reduction <maximumf>, %23, %cst_15 [1] : vector<16x16xf32> to vector<16xf32>
    %25 = vector.shape_cast %24 : vector<16xf32> to vector<16x1xf32>
    %26 = vector.broadcast %25 : vector<16x1xf32> to vector<16x16xf32>
    %27 = arith.subf %23, %26 : vector<16x16xf32>
    %28 = math.exp %27 : vector<16x16xf32>
    %cst_16 = arith.constant dense<0.000000e+00> : vector<16xf32>
    %29 = vector.multi_reduction <add>, %28, %cst_16 [1] : vector<16x16xf32> to vector<16xf32>
    %30 = vector.shape_cast %29 : vector<16xf32> to vector<16x1xf32>
    %cst_17 = arith.constant dense<0.000000e+00> : vector<16x8xf32>
    %31 = tpu.matmul %28, %11, %cst_17 {dimension_numbers = #tpu.dot_dimension_numbers<[1], [0], [0], [1], [0, 0, 1, 1], [], []>} : vector<16x16xf32>, vector<16x8xf32>, vector<16x8xf32> -> vector<16x8xf32>
    %32 = tpu.reciprocal %30 : vector<16x1xf32> -> vector<16x1xf32>
    %33 = vector.broadcast %32 : vector<16x1xf32> to vector<16x8xf32>
    %34 = arith.mulf %31, %33 : vector<16x8xf32>
    %35 = vector.extract_strided_slice %3 {offsets = [0, 8], sizes = [16, 8], strides = [1, 1]} : vector<16x16xf32> to vector<16x8xf32>
    %36 = vector.extract_strided_slice %8 {offsets = [1, 0], sizes = [1, 8], strides = [1, 1]} : vector<2x8xf32> to vector<1x8xf32>
    %cst_18 = arith.constant dense<0.000000e+00> : vector<1x16xf32>
    %37 = tpu.matmul %36, %35, %cst_18 {dimension_numbers = #tpu.dot_dimension_numbers<[1], [1], [0], [0], [0, 0, 1, 0], [], []>} : vector<1x8xf32>, vector<16x8xf32>, vector<1x16xf32> -> vector<1x16xf32>
    %38 = vector.extract_strided_slice %7 {offsets = [0, 1], sizes = [16, 1], strides = [1, 1]} : vector<16x2xf32> to vector<16x1xf32>
    %39 = vector.broadcast %38 : vector<16x1xf32> to vector<16x16xf32>
    %40 = vector.broadcast %37 : vector<1x16xf32> to vector<16x16xf32>
    %41 = arith.addf %39, %40 : vector<16x16xf32>
    %cst_19 = arith.constant 0.000000e+00 : f32
    %42 = vector.broadcast %cst_19 : f32 to vector<16x16xf32>
    %43 = arith.cmpf ogt, %41, %42 : vector<16x16xf32>
    %cst_20 = arith.constant 2.000000e-01 : f32
    %44 = vector.broadcast %cst_20 : f32 to vector<16x16xf32>
    %45 = arith.mulf %44, %41 : vector<16x16xf32>
    %46 = arith.select %43, %41, %45 : vector<16x16xi1>, vector<16x16xf32>
    %47 = arith.addf %46, %10 : vector<16x16xf32>
    %cst_21 = arith.constant dense<0xFF800000> : vector<16xf32>
    %48 = vector.multi_reduction <maximumf>, %47, %cst_21 [1] : vector<16x16xf32> to vector<16xf32>
    %49 = vector.shape_cast %48 : vector<16xf32> to vector<16x1xf32>
    %50 = vector.broadcast %49 : vector<16x1xf32> to vector<16x16xf32>
    %51 = arith.subf %47, %50 : vector<16x16xf32>
    %52 = math.exp %51 : vector<16x16xf32>
    %cst_22 = arith.constant dense<0.000000e+00> : vector<16xf32>
    %53 = vector.multi_reduction <add>, %52, %cst_22 [1] : vector<16x16xf32> to vector<16xf32>
    %54 = vector.shape_cast %53 : vector<16xf32> to vector<16x1xf32>
    %cst_23 = arith.constant dense<0.000000e+00> : vector<16x8xf32>
    %55 = tpu.matmul %52, %35, %cst_23 {dimension_numbers = #tpu.dot_dimension_numbers<[1], [0], [0], [1], [0, 0, 1, 1], [], []>} : vector<16x16xf32>, vector<16x8xf32>, vector<16x8xf32> -> vector<16x8xf32>
    %56 = tpu.reciprocal %54 : vector<16x1xf32> -> vector<16x1xf32>
    %57 = vector.broadcast %56 : vector<16x1xf32> to vector<16x8xf32>
    %58 = arith.mulf %55, %57 : vector<16x8xf32>
    %59 = tpu.concatenate %34, %58 in 1 : vector<16x8xf32>, vector<16x8xf32> -> vector<16x16xf32>
    %60 = arith.addf %59, %6 : vector<16x16xf32>
    %c0_24 = arith.constant 0 : index
    %c0_25 = arith.constant 0 : index
    %61 = vector.load %arg6[%c0_24, %c0_25] : memref<1x16xf32, #tpu.memory_space<vmem>>, vector<1x16xf32>
    %62 = vector.broadcast %61 : vector<1x16xf32> to vector<16x16xf32>
    %63 = arith.addf %60, %62 : vector<16x16xf32>
    %c0_26 = arith.constant 0 : index
    %c0_27 = arith.constant 0 : index
    %64 = vector.load %arg8[%c0_26, %c0_27] : memref<16x16xf32, #tpu.memory_space<vmem>>, vector<16x16xf32>
    tpu.vector_store %arg8[%c0_26, %c0_27], %63 {strides = array<i32>} : memref<16x16xf32, #tpu.memory_space<vmem>>, vector<16x16xf32>,
    return
  }
  func.func @transform_0(%arg0: i32) -> (i32, i32) {
    %c0_i32 = arith.constant 0 : i32
    %c0_i32_0 = arith.constant 0 : i32
    %c0_i32_1 = arith.constant 0 : i32
    return %c0_i32, %c0_i32_0 : i32, i32
  }
  func.func @transform_1(%arg0: i32) -> (i32, i32) {
    %c0_i32 = arith.constant 0 : i32
    %c0_i32_0 = arith.constant 0 : i32
    return %arg0, %c0_i32 : i32, i32
  }
  func.func @transform_2(%arg0: i32) -> (i32, i32) {
    %c0_i32 = arith.constant 0 : i32
    %c0_i32_0 = arith.constant 0 : i32
    %c0_i32_1 = arith.constant 0 : i32
    return %c0_i32, %c0_i32_0 : i32, i32
  }
  func.func @transform_3(%arg0: i32) -> (i32, i32) {
    %c0_i32 = arith.constant 0 : i32
    %c0_i32_0 = arith.constant 0 : i32
    %c0_i32_1 = arith.constant 0 : i32
    return %c0_i32, %c0_i32_0 : i32, i32
  }
  func.func @transform_4(%arg0: i32) -> (i32, i32) {
    %c0_i32 = arith.constant 0 : i32
    %c0_i32_0 = arith.constant 0 : i32
    %c0_i32_1 = arith.constant 0 : i32
    return %c0_i32, %c0_i32_0 : i32, i32
  }
  func.func @transform_5(%arg0: i32) -> (i32, i32) {
    %c0_i32 = arith.constant 0 : i32
    %c0_i32_0 = arith.constant 0 : i32
    %c0_i32_1 = arith.constant 0 : i32
    return %c0_i32, %c0_i32_0 : i32, i32
  }
  func.func @transform_6(%arg0: i32) -> (i32, i32) {
    %c0_i32 = arith.constant 0 : i32
    %c0_i32_0 = arith.constant 0 : i32
    return %arg0, %c0_i32 : i32, i32
  }
  func.func @transform_7(%arg0: i32) -> (i32, i32) {
    %c0_i32 = arith.constant 0 : i32
    %c0_i32_0 = arith.constant 0 : i32
    return %arg0, %c0_i32 : i32, i32
  }
}

</mosaic_0001>

<llo_original>
// kernel: squeeze.5
$region0: #{squeeze.5}
  %s0 = inlined_call_operand.vmem [shape: f32[2,8], index: 0, kind: input, shape index: {}]
  %s1 = inlined_call_operand.vmem [shape: f32[1,16], index: 1, kind: output, shape index: {}]
  $region1: #{squeeze.5} parent=0
    #allocation0 [shape = 'u8[4096]{0}', space=vmem, size = 0x1000, scoped, tag = 'scoped mem for output reshape']
    #allocation1 [shape = 'u8[4096]{0}', space=vmem, size = 0x1000, scoped, tag = 'scoped mem for input reshape']
    %s3 = ssub.s32 4, 1
    %v4 = vld [vmem:[%s0] sm:%s3]
    %5 = vst [vmem:[#allocation1] sm:%s3] %v4
    %v6 = vld [vmem:[#allocation1] sm:$0x1]
    %vm7 = vcmask 64512
    %8 = vst.msk [vmem:[#allocation0] sm:$0x1] %vm7, %v6
    %s9 = scalar_lea.vmem [#allocation1], 1
    %v10 = vld [vmem:[%s9] sm:$0x1]
    %11 = vrot.lane.b32.xlu0 %v10, 8
    %v12 = vpop.permute.xlu0 %11
    %vm13 = vcmask 130112
    %14 = vst.msk [vmem:[#allocation0] sm:$0x1] %vm13, %v12
    %s16 = ssub.s32 2, 1
    %v17 = vld [vmem:[#allocation0] sm:%s16]
    %s19 = ssub.s32 2, 1
    %20 = vst [vmem:[%s1] sm:%s19] %v17

// kernel: gat_layer_forward.1
$region0: #{gat_layer_forward.1}
  #allocation0 [shape = 'u32[]', space=smem, size = 0x4, offset = 0x4, fixed_abs, tag = 'smem constant byte address 0x4 - core index']
  #allocation1 [shape = 'u32[72,128]{1,0:T(1,128)}', space=vmem, size = 0x9000, scoped, tag = 'internal scratch']
  %s0 = inlined_call_operand.vmem [shape: f32[16,8], index: 0, kind: input, shape index: {}, may-alias: {0,1}]
  %s1 = inlined_call_operand.vmem [shape: f32[16,8], index: 1, kind: input, shape index: {}, may-alias: {0,1}]
  %s2 = inlined_call_operand.vmem [shape: f32[8,16], index: 2, kind: input, shape index: {}]
  %s3 = inlined_call_operand.vmem [shape: f32[8,18], index: 3, kind: input, shape index: {}]
  %s4 = inlined_call_operand.vmem [shape: f32[2,8], index: 4, kind: input, shape index: {}]
  %s5 = inlined_call_operand.vmem [shape: f32[1,16], index: 5, kind: input, shape index: {}]
  %s6 = inlined_call_operand.vmem [shape: bf16[16,16], index: 6, kind: input, shape index: {}]
  %s7 = inlined_call_operand.vmem [shape: f32[16,16], index: 7, kind: output, shape index: {}]
  %s8 = sld [smem:[#allocation0]]
  $region38: #{gat_layer_forward.1} parent=0
    _
  %s10 = ssub.s32 1, %s8
  %s11 = scalar_select 0, %s10, %s8
  // Predicated region
  $region2: #{gat_layer_forward.1} parent=0 // pred_check
    _
  $region3: #{gat_layer_forward.1} parent=0 // pred_check_branch
    %13 = sbr.rel (0) target = $region5
  $region4: #{gat_layer_forward.1} parent=0 // pred_region
    _
  $region5: #{gat_layer_forward.1} parent=0 // pred_fallthru
    _
  // Predicated region
  $region6: #{gat_layer_forward.1} parent=0 // pred_check
    _
  $region7: #{gat_layer_forward.1} parent=0 // pred_check_branch
    %15 = sbr.rel (0) target = $region9
  $region8: #{gat_layer_forward.1} parent=0 // pred_region
    _
  $region9: #{gat_layer_forward.1} parent=0 // pred_fallthru
    _
  // Predicated region
  $region10: #{gat_layer_forward.1} parent=0 // pred_check
    _
  $region11: #{gat_layer_forward.1} parent=0 // pred_check_branch
    %17 = sbr.rel (0) target = $region13
  $region12: #{gat_layer_forward.1} parent=0 // pred_region
    _
  $region13: #{gat_layer_forward.1} parent=0 // pred_fallthru
    _
  // Predicated region
  $region14: #{gat_layer_forward.1} parent=0 // pred_check
    _
  $region15: #{gat_layer_forward.1} parent=0 // pred_check_branch
    %19 = sbr.rel (0) target = $region17
  $region16: #{gat_layer_forward.1} parent=0 // pred_region
    _
  $region17: #{gat_layer_forward.1} parent=0 // pred_fallthru
    _
  // Predicated region
  $region18: #{gat_layer_forward.1} parent=0 // pred_check
    _
  $region19: #{gat_layer_forward.1} parent=0 // pred_check_branch
    %21 = sbr.rel (0) target = $region21
  $region20: #{gat_layer_forward.1} parent=0 // pred_region
    _
  $region21: #{gat_layer_forward.1} parent=0 // pred_fallthru
    _
  // Predicated region
  $region22: #{gat_layer_forward.1} parent=0 // pred_check
    _
  $region23: #{gat_layer_forward.1} parent=0 // pred_check_branch
    %23 = sbr.rel (0) target = $region25
  $region24: #{gat_layer_forward.1} parent=0 // pred_region
    _
  $region25: #{gat_layer_forward.1} parent=0 // pred_fallthru
    _
  // Predicated region
  $region26: #{gat_layer_forward.1} parent=0 // pred_check
    _
  $region27: #{gat_layer_forward.1} parent=0 // pred_check_branch
    %25 = sbr.rel (0) target = $region29
  $region28: #{gat_layer_forward.1} parent=0 // pred_region
    _
  $region29: #{gat_layer_forward.1} parent=0 // pred_fallthru
    _
  %v26 = vld [vmem:[%s0] sm:$0xff]
  %v27 = vld [vmem:[%s0 + $0x8] sm:$0xff]
  %v28 = vld [vmem:[%s1] sm:$0xff]
  %v29 = vld [vmem:[%s1 + $0x8] sm:$0xff]
  %v30 = vld [vmem:[%s2] sm:$0xff]
  %vm31 = vcmask 64512
  %v33 = vsel %vm31, %v26, 0
  %v36 = vsel %vm31, %v27, 0
  %38 = vmatpush.msra.mxu0 0.0
  %39 = vmatpush.msra.mxu0 0.0
  %40 = vmatpush.msra.mxu0 0.0
  %41 = vmatpush.msra.mxu0 0.0
  %42 = vmatpush.msra.mxu0 0.0
  %43 = vmatpush.msra.mxu0 0.0
  %44 = vmatpush.msra.mxu0 0.0
  %45 = vmatpush.msra.mxu0 0.0
  %46 = vmatpush.msra.mxu0 0.0
  %47 = vmatpush.msra.mxu0 0.0
  %48 = vmatpush.msra.mxu0 0.0
  %49 = vmatpush.msra.mxu0 0.0
  %50 = vmatpush.msra.mxu0 0.0
  %51 = vmatpush.msra.mxu0 0.0
  %52 = vmatpush.msra.mxu0 0.0
  %53 = vmatpush.msra.mxu0 %v30
  %54 = vmatmul.f32.gmra.mxu0 %v33
  %v55 = vpop.f32.mrf.mxu0
  %v56 = vadd.f32 0.0, %v55
  %57 = vmatmul.f32.gmra.mxu0 %v36
  %v58 = vpop.f32.mrf.mxu0
  %v59 = vadd.f32 0.0, %v58
  %60 = vdwg.mxu0
  %v61 = vld [vmem:[%s3] sm:$0xff]
  %v63 = vsel %vm31, %v28, 0
  %v66 = vsel %vm31, %v29, 0
  %68 = vmatpush.msra.mxu0 0.0
  %69 = vmatpush.msra.mxu0 0.0
  %70 = vmatpush.msra.mxu0 0.0
  %71 = vmatpush.msra.mxu0 0.0
  %72 = vmatpush.msra.mxu0 0.0
  %73 = vmatpush.msra.mxu0 0.0
  %74 = vmatpush.msra.mxu0 0.0
  %75 = vmatpush.msra.mxu0 0.0
  %76 = vmatpush.msra.mxu0 0.0
  %77 = vmatpush.msra.mxu0 0.0
  %78 = vmatpush.msra.mxu0 0.0
  %79 = vmatpush.msra.mxu0 0.0
  %80 = vmatpush.msra.mxu0 0.0
  %81 = vmatpush.msra.mxu0 0.0
  %82 = vmatpush.msra.mxu0 0.0
  %83 = vmatpush.msra.mxu0 %v61
  %84 = vmatmul.f32.gmra.mxu0 %v63
  %v85 = vpop.f32.mrf.mxu0
  %v86 = vadd.f32 0.0, %v85
  %87 = vmatmul.f32.gmra.mxu0 %v66
  %v88 = vpop.f32.mrf.mxu0
  %v89 = vadd.f32 0.0, %v88
  %90 = vdwg.mxu0
  %v91 = vld [vmem:[%s4] sm:$0x3]
  %v92 = vld [vmem:[%s6] sm:$0xf]
  %v93 = vld [vmem:[%s6 + $0x4] sm:$0xf]
  %v94 = vunpack.c.l.bf16 %v92
  %v95 = vunpack.c.l.bf16 %v93
  %v97 = vsel %vm31, %v91, 0
  %v100 = vsel %vm31, %v56, 0
  %v103 = vsel %vm31, %v59, 0
  %105 = vmatpush.xpose.msra.mxu0 0.0
  %106 = vmatpush.xpose.msra.mxu0 0.0
  %107 = vmatpush.xpose.msra.mxu0 0.0
  %108 = vmatpush.xpose.msra.mxu0 0.0
  %109 = vmatpush.xpose.msra.mxu0 0.0
  %110 = vmatpush.xpose.msra.mxu0 0.0
  %111 = vmatpush.xpose.msra.mxu0 0.0
  %112 = vmatpush.xpose.msra.mxu0 0.0
  %113 = vmatpush.xpose.msra.mxu0 0.0
  %114 = vmatpush.xpose.msra.mxu0 0.0
  %115 = vmatpush.xpose.msra.mxu0 0.0
  %116 = vmatpush.xpose.msra.mxu0 0.0
  %117 = vmatpush.xpose.msra.mxu0 0.0
  %118 = vmatpush.xpose.msra.mxu0 0.0
  %119 = vmatpush.xpose.msra.mxu0 %v103
  %120 = vmatpush.xpose.msra.mxu0 %v100
  %121 = vmatmul.f32.gmra.mxu0 %v97
  %v122 = vpop.f32.mrf.mxu0
  %v123 = vadd.f32 0.0, %v122
  %124 = vdwg.mxu0
  %126 = vset.pattern.permute.xlu0 16
  %127 = vperm.xlu0 %126, %v86
  %v128 = vpop.permute.xlu0 %127
  %131 = vset.pattern.permute.xlu0 16
  %132 = vperm.xlu0 %131, %v89
  %v133 = vpop.permute.xlu0 %132
  %v135 = vperm.slane %v123, 0
  %v136 = vadd.f32 %v128, %v135
  %v137 = vadd.f32 %v133, %v135
  %vm138 = vcmp.gt.f32.partialorder %v136, 0.0
  %vm139 = vcmp.gt.f32.partialorder %v137, 0.0
  %v140 = vmul.f32 %v136, 0.2
  %v141 = vmul.f32 %v137, 0.2
  %v142 = vsel %vm138, %v136, %v140
  %v143 = vsel %vm139, %v137, %v141
  %v144 = vadd.f32 %v142, %v94
  %v145 = vadd.f32 %v143, %v95
  %vm146 = vcmask 130048
  %v147 = vsel %vm146, %v144, -inf
  %148 = vmax.xlane.f32.xlu0 %v147
  %v149 = vpop.xlane.xlu0 %148
  %v150 = vsel %vm146, %v145, -inf
  %151 = vmax.xlane.f32.xlu0 %v150
  %v152 = vpop.xlane.xlu0 %151
  %v153 = vsub.f32 %v144, %v149
  %v154 = vsub.f32 %v145, %v152
  %v155 = vmul.f32 %v153, 1.442695
  %v156 = vpow.pop %v155
  %v157 = vmul.f32 %v154, 1.442695
  %v158 = vpow.pop %v157
  %v159 = vsel %vm146, %v156, 0.0
  %160 = vadd.xlane.f32.xlu0 %v159
  %v161 = vpop.xlane.xlu0 %160
  %v162 = vsel %vm146, %v158, 0.0
  %163 = vadd.xlane.f32.xlu0 %v162
  %v164 = vpop.xlane.xlu0 %163
  %v166 = vsel %vm146, %v156, 0
  %v169 = vsel %vm146, %v158, 0
  %171 = vmatpush.msra.mxu0 0.0
  %172 = vmatpush.msra.mxu0 0.0
  %173 = vmatpush.msra.mxu0 0.0
  %174 = vmatpush.msra.mxu0 0.0
  %175 = vmatpush.msra.mxu0 0.0
  %176 = vmatpush.msra.mxu0 0.0
  %177 = vmatpush.msra.mxu0 0.0
  %178 = vmatpush.msra.mxu0 0.0
  %179 = vmatpush.msra.mxu0 0.0
  %180 = vmatpush.msra.mxu0 0.0
  %181 = vmatpush.msra.mxu0 0.0
  %182 = vmatpush.msra.mxu0 0.0
  %183 = vmatpush.msra.mxu0 0.0
  %184 = vmatpush.msra.mxu0 0.0
  %185 = vmatpush.msra.mxu0 %v59
  %186 = vmatpush.msra.mxu0 %v56
  %187 = vmatmul.f32.gmra.mxu0 %v166
  %v188 = vpop.f32.mrf.mxu0
  %v189 = vadd.f32 0.0, %v188
  %190 = vmatmul.f32.gmra.mxu0 %v169
  %v191 = vpop.f32.mrf.mxu0
  %v192 = vadd.f32 0.0, %v191
  %193 = vdwg.mxu0
  %v194 = vrcp.pop %v161
  %v195 = vmul.f32 %v161, %v194
  %v196 = vsub.f32 1.0, %v195
  %v197 = vmul.f32 %v194, %v196
  %v198 = vadd.f32 %v194, %v197
  %vm199 = vweird.f32 %v161
  %vm200 = vweird.f32 %v194
  %vm201 = vmor %vm199, %vm200
  %v202 = vsel %vm201, %v194, %v198
  %v203 = vand.u32 2147483647, %v161
  %vm204 = vcmp.eq.f32.partialorder %v203, 8.507059e+37
  %v205 = vand.u32 %v161, 2147483648
  %v206 = vor.u32 1.1754944e-38, %v205
  %v207 = vsel %vm204, %v206, %v202
  %v208 = vrcp.pop %v164
  %v209 = vmul.f32 %v164, %v208
  %v210 = vsub.f32 1.0, %v209
  %v211 = vmul.f32 %v208, %v210
  %v212 = vadd.f32 %v208, %v211
  %vm213 = vweird.f32 %v164
  %vm214 = vweird.f32 %v208
  %vm215 = vmor %vm213, %vm214
  %v216 = vsel %vm215, %v208, %v212
  %v217 = vand.u32 2147483647, %v164
  %vm218 = vcmp.eq.f32.partialorder %v217, 8.507059e+37
  %v219 = vand.u32 %v164, 2147483648
  %v220 = vor.u32 1.1754944e-38, %v219
  %v221 = vsel %vm218, %v220, %v216
  %v222 = vmul.f32 %v189, %v207
  %v223 = vmul.f32 %v192, %v221
  %v224 = vrot.slane %v91, 1
  %225 = vrot.lane.b32.xlu0 %v56, 120
  %v226 = vpop.permute.xlu0 %225
  %227 = vrot.lane.b32.xlu0 %v59, 120
  %v228 = vpop.permute.xlu0 %227
  %v229 = vsel %vm31, %v224, 0
  %v231 = vsel %vm31, %v226, 0
  %v233 = vsel %vm31, %v228, 0
  %235 = vmatpush.xpose.msra.mxu0 0.0
  %236 = vmatpush.xpose.msra.mxu0 0.0
  %237 = vmatpush.xpose.msra.mxu0 0.0
  %238 = vmatpush.xpose.msra.mxu0 0.0
  %239 = vmatpush.xpose.msra.mxu0 0.0
  %240 = vmatpush.xpose.msra.mxu0 0.0
  %241 = vmatpush.xpose.msra.mxu0 0.0
  %242 = vmatpush.xpose.msra.mxu0 0.0
  %243 = vmatpush.xpose.msra.mxu0 0.0
  %244 = vmatpush.xpose.msra.mxu0 0.0
  %245 = vmatpush.xpose.msra.mxu0 0.0
  %246 = vmatpush.xpose.msra.mxu0 0.0
  %247 = vmatpush.xpose.msra.mxu0 0.0
  %248 = vmatpush.xpose.msra.mxu0 0.0
  %249 = vmatpush.xpose.msra.mxu0 %v233
  %250 = vmatpush.xpose.msra.mxu0 %v231
  %251 = vmatmul.f32.gmra.mxu0 %v229
  %v252 = vpop.f32.mrf.mxu0
  %v253 = vadd.f32 0.0, %v252
  %254 = vdwg.mxu0
  %255 = vset.pattern.permute.xlu0 17
  %256 = vperm.xlu0 %255, %v86
  %v257 = vpop.permute.xlu0 %256
  %259 = vset.pattern.permute.xlu0 17
  %260 = vperm.xlu0 %259, %v89
  %v261 = vpop.permute.xlu0 %260
  %v263 = vperm.slane %v253, 0
  %v264 = vadd.f32 %v257, %v263
  %v265 = vadd.f32 %v261, %v263
  %vm266 = vcmp.gt.f32.partialorder %v264, 0.0
  %vm267 = vcmp.gt.f32.partialorder %v265, 0.0
  %v268 = vmul.f32 %v264, 0.2
  %v269 = vmul.f32 %v265, 0.2
  %v270 = vsel %vm266, %v264, %v268
  %v271 = vsel %vm267, %v265, %v269
  %v272 = vadd.f32 %v270, %v94
  %v273 = vadd.f32 %v271, %v95
  %v274 = vsel %vm146, %v272, -inf
  %275 = vmax.xlane.f32.xlu0 %v274
  %v276 = vpop.xlane.xlu0 %275
  %v277 = vsel %vm146, %v273, -inf
  %278 = vmax.xlane.f32.xlu0 %v277
  %v279 = vpop.xlane.xlu0 %278
  %v280 = vsub.f32 %v272, %v276
  %v281 = vsub.f32 %v273, %v279
  %v282 = vmul.f32 %v280, 1.442695
  %v283 = vpow.pop %v282
  %v284 = vmul.f32 %v281, 1.442695
  %v285 = vpow.pop %v284
  %v286 = vsel %vm146, %v283, 0.0
  %287 = vadd.xlane.f32.xlu0 %v286
  %v288 = vpop.xlane.xlu0 %287
  %v289 = vsel %vm146, %v285, 0.0
  %290 = vadd.xlane.f32.xlu0 %v289
  %v291 = vpop.xlane.xlu0 %290
  %v295 = vsel %vm146, %v283, 0
  %v298 = vsel %vm146, %v285, 0
  %300 = vmatpush.msra.mxu0 0.0
  %301 = vmatpush.msra.mxu0 0.0
  %302 = vmatpush.msra.mxu0 0.0
  %303 = vmatpush.msra.mxu0 0.0
  %304 = vmatpush.msra.mxu0 0.0
  %305 = vmatpush.msra.mxu0 0.0
  %306 = vmatpush.msra.mxu0 0.0
  %307 = vmatpush.msra.mxu0 0.0
  %308 = vmatpush.msra.mxu0 0.0
  %309 = vmatpush.msra.mxu0 0.0
  %310 = vmatpush.msra.mxu0 0.0
  %311 = vmatpush.msra.mxu0 0.0
  %312 = vmatpush.msra.mxu0 0.0
  %313 = vmatpush.msra.mxu0 0.0
  %314 = vmatpush.msra.mxu0 %v228
  %315 = vmatpush.msra.mxu0 %v226
  %316 = vmatmul.f32.gmra.mxu0 %v295
  %v317 = vpop.f32.mrf.mxu0
  %v318 = vadd.f32 0.0, %v317
  %319 = vmatmul.f32.gmra.mxu0 %v298
  %v320 = vpop.f32.mrf.mxu0
  %v321 = vadd.f32 0.0, %v320
  %322 = vdwg.mxu0
  %v323 = vrcp.pop %v288
  %v324 = vmul.f32 %v288, %v323
  %v325 = vsub.f32 1.0, %v324
  %v326 = vmul.f32 %v323, %v325
  %v327 = vadd.f32 %v323, %v326
  %vm328 = vweird.f32 %v288
  %vm329 = vweird.f32 %v323
  %vm330 = vmor %vm328, %vm329
  %v331 = vsel %vm330, %v323, %v327
  %v332 = vand.u32 2147483647, %v288
  %vm333 = vcmp.eq.f32.partialorder %v332, 8.507059e+37
  %v334 = vand.u32 %v288, 2147483648
  %v335 = vor.u32 1.1754944e-38, %v334
  %v336 = vsel %vm333, %v335, %v331
  %v337 = vrcp.pop %v291
  %v338 = vmul.f32 %v291, %v337
  %v339 = vsub.f32 1.0, %v338
  %v340 = vmul.f32 %v337, %v339
  %v341 = vadd.f32 %v337, %v340
  %vm342 = vweird.f32 %v291
  %vm343 = vweird.f32 %v337
  %vm344 = vmor %vm342, %vm343
  %v345 = vsel %vm344, %v337, %v341
  %v346 = vand.u32 2147483647, %v291
  %vm347 = vcmp.eq.f32.partialorder %v346, 8.507059e+37
  %v348 = vand.u32 %v291, 2147483648
  %v349 = vor.u32 1.1754944e-38, %v348
  %v350 = vsel %vm347, %v349, %v345
  %v351 = vmul.f32 %v318, %v336
  %v352 = vmul.f32 %v321, %v350
  %355 = vrot.lane.b32.xlu0 %v351, 8
  %v356 = vpop.permute.xlu0 %355
  %357 = vrot.lane.b32.xlu0 %v352, 8
  %v358 = vpop.permute.xlu0 %357
  %v361 = vsel %vm31, %v222, %v356
  %v362 = vsel %vm31, %v223, %v358
  %v363 = vadd.f32 %v361, %v86
  %v364 = vadd.f32 %v362, %v89
  %v365 = vld [vmem:[%s5] sm:$0x1]
  %v367 = vperm.slane %v365, 0
  %v369 = vadd.f32 %v363, %v367
  %v370 = vadd.f32 %v364, %v367
  %371 = vst.msk [vmem:[%s7] sm:$0xff] %vm146, %v369
  %372 = vst.msk [vmem:[%s7 + $0x8] sm:$0xff] %vm146, %v370
  // Predicated region
  $region30: #{gat_layer_forward.1} parent=0 // pred_check
    _
  $region31: #{gat_layer_forward.1} parent=0 // pred_check_branch
    %374 = sbr.rel (0) target = $region33
  $region32: #{gat_layer_forward.1} parent=0 // pred_region
    _
  $region33: #{gat_layer_forward.1} parent=0 // pred_fallthru
    _
  // Predicated region
  $region34: #{gat_layer_forward.1} parent=0 // pred_check
    _
  $region35: #{gat_layer_forward.1} parent=0 // pred_check_branch
    %376 = sbr.rel (0) target = $region37
  $region36: #{gat_layer_forward.1} parent=0 // pred_region
    _
  $region37: #{gat_layer_forward.1} parent=0 // pred_fallthru
    _

</llo_original>
